<compile_context>
chip_gen: v5e
topology: v5e:2x2
jax: 0.10.0
libtpu: 0.0.40
codegen_flags: <defaults>
</compile_context>

<pallas_src>
import jax
import jax.numpy as jnp
from jax import lax
from jax.experimental import pallas as pl
from jax.experimental.pallas import tpu as pltpu

LATENT_DIM = 64
TILE_B = 1024      # default batch tile (swept 512-2048; 1024 is a good middle)
MIN_TILE_B = 256   # don't shrink below this when splitting for 2 TCs


def _round_up(n, m):
    return ((n + m - 1) // m) * m


def _leaky_relu(x, slope=0.2):
    return jnp.where(x > 0, x, slope * x)


def discriminator_kernel(x_ref, w1_ref, b1_ref, w2_ref, b2_ref, w3_ref, b3_ref,
                         o_ref):
    """Fused 3-layer MLP forward on one (tb, latent_dim) batch tile."""
    # Layer 1: Linear(64 -> 256) + LeakyReLU(0.2). bf16 MXU inputs, f32 acc.
    x = x_ref[...].astype(jnp.bfloat16)                               # (tb, 64)
    h1 = jnp.dot(x, w1_ref[...], preferred_element_type=jnp.float32)  # (tb, 256)
    h1 = _leaky_relu(h1 + b1_ref[...])

    # Layer 2: Linear(256 -> 128) + LeakyReLU(0.2).
    h2 = jnp.dot(h1.astype(jnp.bfloat16), w2_ref[...],
                 preferred_element_type=jnp.float32)                  # (tb, 128)
    h2 = _leaky_relu(h2 + b2_ref[...])

    # Layer 3: Linear(128 -> 1), computed lane-dense as a (1, tb) row:
    #   (1, 128) x (tb, 128)^T -> (1, tb)  (MXU has plenty of slack here).
    out_row = lax.dot_general(
        w3_ref[...], h2,
        dimension_numbers=(((1,), (1,)), ((), ())),
        preferred_element_type=jnp.float32)                           # (1, tb)
    out_row = out_row + b3_ref[...]                                   # (1,1) bcast

    o_ref[...] = out_row.reshape(o_ref.shape).astype(o_ref.dtype)     # (1, 1, tb)


def _select_tile(B, tile_b):
    """Batch tile: multiple of 8, large (overhead amortization), but keep
    >= 2 grid steps when B is big enough so v7x can use both TensorCores."""
    tb = _round_up(min(tile_b, B), 8)
    if B >= 2 * MIN_TILE_B:
        tb = min(tb, max(MIN_TILE_B, _round_up(pl.cdiv(B, 2), 8)))
    return tb


def discriminator_forward(x, params, *, tile_b=TILE_B):
    """x: (B, latent_dim) float32 -> (B, 1) float32."""
    w1, b1, w2, b2, w3_row, b3 = params
    B, D = x.shape

    tb = _select_tile(B, tile_b)
    grid_b = pl.cdiv(B, tb)

    # Weights / biases: full-array blocks, constant index_map -> VMEM resident.
    def resident(a):
        return pl.BlockSpec(a.shape, lambda i: (0,) * a.ndim)

    out = pl.pallas_call(
        discriminator_kernel,
        out_shape=jax.ShapeDtypeStruct((grid_b, 1, tb), jnp.float32),
        grid=(grid_b,),
        in_specs=[
            pl.BlockSpec((tb, D), lambda i: (i, 0)),   # x: batch-tiled
            resident(w1), resident(b1),
            resident(w2), resident(b2),
            resident(w3_row), resident(b3),
        ],
        # Lane-dense (1, 1, tb) output block (last two dims: 1 == full, tb == full).
        out_specs=pl.BlockSpec((1, 1, tb), lambda i: (i, 0, 0)),
        compiler_params=pltpu.CompilerParams(
            dimension_semantics=("parallel",)),
    )(x, w1, b1, w2, b2, w3_row, b3)

    # (grid_b, 1, tb) -> flat -> drop tail-block garbage rows -> (B, 1).
    return out.reshape(grid_b * tb)[:B].reshape(B, 1)


def init_params(key, latent_dim=LATENT_DIM):
    """Deterministic PyTorch-style (Kaiming-uniform-ish) init.

    W1/W2 stored as (in, out) bf16 (MXU-native); W3 as a (1, 128) f32 row;
    biases as f32 (1, out) rows; b3 as (1, 1)."""
    dims = [(latent_dim, 256), (256, 128), (128, 1)]
    raw = []
    for fan_in, fan_out in dims:
        kw, kb, key = jax.random.split(key, 3)
        bound = 1.0 / jnp.sqrt(fan_in)
        w = jax.random.uniform(kw, (fan_in, fan_out), jnp.float32,
                               minval=-bound, maxval=bound)
        b = jax.random.uniform(kb, (1, fan_out), jnp.float32,
                               minval=-bound, maxval=bound)
        raw.extend([w, b])
    w1, b1, w2, b2, w3, b3 = raw
    return (w1.astype(jnp.bfloat16), b1,
            w2.astype(jnp.bfloat16), b2,
            w3.reshape(1, 128), b3.reshape(1, 1))


def reference_forward(x, params):
    """Plain-JAX reference with the same bf16-in / f32-acc numerics."""
    w1, b1, w2, b2, w3_row, b3 = params
    h1 = _leaky_relu(jnp.dot(x.astype(jnp.bfloat16), w1,
                             preferred_element_type=jnp.float32) + b1)
    h2 = _leaky_relu(jnp.dot(h1.astype(jnp.bfloat16), w2,
                             preferred_element_type=jnp.float32) + b2)
    return jnp.dot(h2, w3_row.T) + b3


if __name__ == "__main__":
    key = jax.random.PRNGKey(0)
    k1, k2, k3, k_p = jax.random.split(key, 4)
    params = init_params(k_p)

    # Small batch (single tile, tb == B).
    x = jax.random.normal(k1, (8, LATENT_DIM), dtype=jnp.float32)
    out = jax.block_until_ready(discriminator_forward(x, params))
    ref = reference_forward(x, params)
    assert out.shape == (8, 1), out.shape
    assert jnp.allclose(out, ref, atol=2e-3, rtol=2e-3), (
        f"max abs err {jnp.max(jnp.abs(out - ref))}")

    # Batch not a multiple of 8 (single tile with out-of-bounds tail rows).
    x = jax.random.normal(k2, (300, LATENT_DIM), dtype=jnp.float32)
    out = jax.block_until_ready(discriminator_forward(x, params))
    ref = reference_forward(x, params)
    assert out.shape == (300, 1), out.shape
    assert jnp.allclose(out, ref, atol=2e-3, rtol=2e-3), (
        f"max abs err {jnp.max(jnp.abs(out - ref))}")

    # Larger batch: exercises grid > 1 (two-TC split on v7x) + ragged tail.
    x = jax.random.normal(k3, (1043, LATENT_DIM), dtype=jnp.float32)
    out = jax.block_until_ready(discriminator_forward(x, params))
    ref = reference_forward(x, params)
    assert out.shape == (1043, 1), out.shape
    assert jnp.allclose(out, ref, atol=2e-3, rtol=2e-3), (
        f"max abs err {jnp.max(jnp.abs(out - ref))}")

    print("KERNEL_OK")
</pallas_src>

<mosaic_0001>
module attributes {stable_mosaic.version = 11 : i64} {
  func.func @discriminator_kernel(%arg0: i32, %arg1: memref<8x64xf32, #tpu.memory_space<vmem>>, %arg2: memref<64x256xbf16, #tpu.memory_space<vmem>>, %arg3: memref<1x256xf32, #tpu.memory_space<vmem>>, %arg4: memref<256x128xbf16, #tpu.memory_space<vmem>>, %arg5: memref<1x128xf32, #tpu.memory_space<vmem>>, %arg6: memref<1x128xf32, #tpu.memory_space<vmem>>, %arg7: memref<1x1xf32, #tpu.memory_space<vmem>>, %arg8: memref<1x1x8xf32, #tpu.memory_space<vmem>>) attributes {dimension_semantics = [#tpu.dimension_semantics<parallel>], iteration_bounds = array<i64: 1>, scalar_prefetch = 0 : i64, scratch_operands = 0 : i64, tpu.core_type = #tpu.core_type<tc>, window_params = [{transform_indices = @transform_0, window_bounds = array<i64: 8, 64>}, {pipeline_mode = #tpu.pipeline_mode<synchronous>, transform_indices = @transform_1, window_bounds = array<i64: 64, 256>}, {pipeline_mode = #tpu.pipeline_mode<synchronous>, transform_indices = @transform_2, window_bounds = array<i64: 1, 256>}, {pipeline_mode = #tpu.pipeline_mode<synchronous>, transform_indices = @transform_3, window_bounds = array<i64: 256, 128>}, {pipeline_mode = #tpu.pipeline_mode<synchronous>, transform_indices = @transform_4, window_bounds = array<i64: 1, 128>}, {pipeline_mode = #tpu.pipeline_mode<synchronous>, transform_indices = @transform_5, window_bounds = array<i64: 1, 128>}, {pipeline_mode = #tpu.pipeline_mode<synchronous>, transform_indices = @transform_6, window_bounds = array<i64: 1, 1>}, {transform_indices = @transform_7, window_bounds = array<i64: 1, 1, 8>}]} {
    %c0 = arith.constant 0 : index
    %c0_0 = arith.constant 0 : index
    %0 = vector.load %arg1[%c0, %c0_0] : memref<8x64xf32, #tpu.memory_space<vmem>>, vector<8x64xf32>
    %1 = arith.truncf %0 : vector<8x64xf32> to vector<8x64xbf16>
    %c0_1 = arith.constant 0 : index
    %c0_2 = arith.constant 0 : index
    %2 = vector.load %arg2[%c0_1, %c0_2] : memref<64x256xbf16, #tpu.memory_space<vmem>>, vector<64x256xbf16>
    %cst = arith.constant dense<0.000000e+00> : vector<8x256xf32>
    %3 = tpu.matmul %1, %2, %cst {dimension_numbers = #tpu.dot_dimension_numbers<[1], [0], [0], [1], [0, 0, 1, 1], [], []>} : vector<8x64xbf16>, vector<64x256xbf16>, vector<8x256xf32> -> vector<8x256xf32>
    %c0_3 = arith.constant 0 : index
    %c0_4 = arith.constant 0 : index
    %4 = vector.load %arg3[%c0_3, %c0_4] : memref<1x256xf32, #tpu.memory_space<vmem>>, vector<1x256xf32>
    %5 = vector.broadcast %4 : vector<1x256xf32> to vector<8x256xf32>
    %6 = arith.addf %3, %5 : vector<8x256xf32>
    %cst_5 = arith.constant 0.000000e+00 : f32
    %7 = vector.broadcast %cst_5 : f32 to vector<8x256xf32>
    %8 = arith.cmpf ogt, %6, %7 : vector<8x256xf32>
    %cst_6 = arith.constant 2.000000e-01 : f32
    %9 = vector.broadcast %cst_6 : f32 to vector<8x256xf32>
    %10 = arith.mulf %9, %6 : vector<8x256xf32>
    %11 = arith.select %8, %6, %10 : vector<8x256xi1>, vector<8x256xf32>
    %12 = arith.truncf %11 : vector<8x256xf32> to vector<8x256xbf16>
    %c0_7 = arith.constant 0 : index
    %c0_8 = arith.constant 0 : index
    %13 = vector.load %arg4[%c0_7, %c0_8] : memref<256x128xbf16, #tpu.memory_space<vmem>>, vector<256x128xbf16>
    %cst_9 = arith.constant dense<0.000000e+00> : vector<8x128xf32>
    %14 = tpu.matmul %12, %13, %cst_9 {dimension_numbers = #tpu.dot_dimension_numbers<[1], [0], [0], [1], [0, 0, 1, 1], [], []>} : vector<8x256xbf16>, vector<256x128xbf16>, vector<8x128xf32> -> vector<8x128xf32>
    %c0_10 = arith.constant 0 : index
    %c0_11 = arith.constant 0 : index
    %15 = vector.load %arg5[%c0_10, %c0_11] : memref<1x128xf32, #tpu.memory_space<vmem>>, vector<1x128xf32>
    %16 = vector.broadcast %15 : vector<1x128xf32> to vector<8x128xf32>
    %17 = arith.addf %14, %16 : vector<8x128xf32>
    %cst_12 = arith.constant 0.000000e+00 : f32
    %18 = vector.broadcast %cst_12 : f32 to vector<8x128xf32>
    %19 = arith.cmpf ogt, %17, %18 : vector<8x128xf32>
    %cst_13 = arith.constant 2.000000e-01 : f32
    %20 = vector.broadcast %cst_13 : f32 to vector<8x128xf32>
    %21 = arith.mulf %20, %17 : vector<8x128xf32>
    %22 = arith.select %19, %17, %21 : vector<8x128xi1>, vector<8x128xf32>
    %c0_14 = arith.constant 0 : index
    %c0_15 = arith.constant 0 : index
    %23 = vector.load %arg6[%c0_14, %c0_15] : memref<1x128xf32, #tpu.memory_space<vmem>>, vector<1x128xf32>
    %cst_16 = arith.constant dense<0.000000e+00> : vector<1x8xf32>
    %24 = tpu.matmul %23, %22, %cst_16 {dimension_numbers = #tpu.dot_dimension_numbers<[1], [1], [0], [0], [0, 0, 1, 0], [], []>} : vector<1x128xf32>, vector<8x128xf32>, vector<1x8xf32> -> vector<1x8xf32>
    %c0_17 = arith.constant 0 : index
    %c0_18 = arith.constant 0 : index
    %25 = vector.load %arg7[%c0_17, %c0_18] : memref<1x1xf32, #tpu.memory_space<vmem>>, vector<1x1xf32>
    %26 = vector.broadcast %25 : vector<1x1xf32> to vector<1x8xf32>
    %27 = arith.addf %24, %26 : vector<1x8xf32>
    %28 = vector.shape_cast %27 : vector<1x8xf32> to vector<1x1x8xf32>
    %c0_19 = arith.constant 0 : index
    %c0_20 = arith.constant 0 : index
    %c0_21 = arith.constant 0 : index
    %29 = vector.load %arg8[%c0_19, %c0_20, %c0_21] : memref<1x1x8xf32, #tpu.memory_space<vmem>>, vector<1x1x8xf32>
    tpu.vector_store %arg8[%c0_19, %c0_20, %c0_21], %28 {strides = array<i32>} : memref<1x1x8xf32, #tpu.memory_space<vmem>>, vector<1x1x8xf32>,
    return
  }
  func.func @transform_0(%arg0: i32) -> (i32, i32) {
    %c0_i32 = arith.constant 0 : i32
    %c0_i32_0 = arith.constant 0 : i32
    return %arg0, %c0_i32 : i32, i32
  }
  func.func @transform_1(%arg0: i32) -> (i32, i32) {
    %c0_i32 = arith.constant 0 : i32
    %c0_i32_0 = arith.constant 0 : i32
    %c0_i32_1 = arith.constant 0 : i32
    return %c0_i32, %c0_i32_0 : i32, i32
  }
  func.func @transform_2(%arg0: i32) -> (i32, i32) {
    %c0_i32 = arith.constant 0 : i32
    %c0_i32_0 = arith.constant 0 : i32
    %c0_i32_1 = arith.constant 0 : i32
    return %c0_i32, %c0_i32_0 : i32, i32
  }
  func.func @transform_3(%arg0: i32) -> (i32, i32) {
    %c0_i32 = arith.constant 0 : i32
    %c0_i32_0 = arith.constant 0 : i32
    %c0_i32_1 = arith.constant 0 : i32
    return %c0_i32, %c0_i32_0 : i32, i32
  }
  func.func @transform_4(%arg0: i32) -> (i32, i32) {
    %c0_i32 = arith.constant 0 : i32
    %c0_i32_0 = arith.constant 0 : i32
    %c0_i32_1 = arith.constant 0 : i32
    return %c0_i32, %c0_i32_0 : i32, i32
  }
  func.func @transform_5(%arg0: i32) -> (i32, i32) {
    %c0_i32 = arith.constant 0 : i32
    %c0_i32_0 = arith.constant 0 : i32
    %c0_i32_1 = arith.constant 0 : i32
    return %c0_i32, %c0_i32_0 : i32, i32
  }
  func.func @transform_6(%arg0: i32) -> (i32, i32) {
    %c0_i32 = arith.constant 0 : i32
    %c0_i32_0 = arith.constant 0 : i32
    %c0_i32_1 = arith.constant 0 : i32
    return %c0_i32, %c0_i32_0 : i32, i32
  }
  func.func @transform_7(%arg0: i32) -> (i32, i32, i32) {
    %c0_i32 = arith.constant 0 : i32
    %c0_i32_0 = arith.constant 0 : i32
    %c0_i32_1 = arith.constant 0 : i32
    return %arg0, %c0_i32, %c0_i32_0 : i32, i32, i32
  }
}

</mosaic_0001>

<llo_original>
// kernel: tpu_custom_call.1
$region0: #{tpu_custom_call.1}
  #allocation0 [shape = 'u32[]', space=smem, size = 0x4, offset = 0x4, fixed_abs, tag = 'smem constant byte address 0x4 - core index']
  #allocation1 [shape = 'u32[72,128]{1,0:T(1,128)}', space=vmem, size = 0x9000, scoped, tag = 'internal scratch']
  #allocation2 [shape = 'f32[1,1]{1,0:T(1,128)S(1)}', space=vmem, size = 0x200, scoped, tag = 'scoped memory for tpu_custom_call.1']
  %s0 = inlined_call_operand.hbm [shape: f32[8,64], index: 0, kind: input, shape index: {}]
  %s1 = inlined_call_operand.hbm [shape: bf16[64,256], index: 1, kind: input, shape index: {}]
  %s2 = inlined_call_operand.vmem [shape: f32[1,256], index: 2, kind: input, shape index: {}]
  %s3 = inlined_call_operand.hbm [shape: bf16[256,128], index: 3, kind: input, shape index: {}]
  %s4 = inlined_call_operand.vmem [shape: f32[1,128], index: 4, kind: input, shape index: {}]
  %s5 = inlined_call_operand.vmem [shape: f32[1,128], index: 5, kind: input, shape index: {}]
  %s6 = inlined_call_operand.<no memory space> [shape: f32[1,1], index: 6, kind: input, shape index: {}]
  %s7 = inlined_call_operand.hbm [shape: f32[1,1,8], index: 7, kind: output, shape index: {}]
  %s8 = sld [smem:[#allocation0]]
  $region50: #{tpu_custom_call.1} parent=0
    _
  %s10 = ssub.s32 1, %s8
  %s11 = scalar_select 0, %s10, %s8
  %v12 = vstv %s6
  %13 = vst [vmem:[#allocation2] sm:$0x1] %v12
  $region1: #{tpu_custom_call.1} parent=0
    #allocation3 [shape = 'u8[4096]{0}', space=vmem, size = 0x1000, scoped, tag = 'input window, operand 0, single buffered']
    #allocation4 [shape = 's32[1]{0}', space=sflag, size = 0x4, scoped, tag = 'scoped memory for tpu_custom_call.1']
    #allocation5 [shape = 's32[1]{0}', space=sflag, size = 0x4, scoped, tag = 'scoped memory for tpu_custom_call.1']
    #allocation6 [shape = 'u8[32768]{0}', space=vmem, size = 0x8000, scoped, tag = 'input window, operand 1, single buffered']
    #allocation7 [shape = 's32[1]{0}', space=sflag, size = 0x4, scoped, tag = 'scoped memory for tpu_custom_call.1']
    #allocation8 [shape = 'u8[65536]{0}', space=vmem, size = 0x10000, scoped, tag = 'input window, operand 3, single buffered']
    #allocation9 [shape = 'u8[512]{0}', space=vmem, size = 0x400, scoped, tag = 'output window, operand 0, single buffered']
    %14 = vsyncpa [#allocation4], 0
    %15 = vsyncpa [#allocation7], 0
    %16 = vsyncpa [#allocation5], 0
    // Predicated region
    $region2: #{tpu_custom_call.1} parent=1 // pred_check
      _
    $region3: #{tpu_custom_call.1} parent=1 // pred_check_branch
      %18 = sbr.rel (0) target = $region5
    $region4: #{tpu_custom_call.1} parent=1 // pred_region
      %20 = vsyncadd [#allocation4], 0
      %s22 = sshll.u32 %s0, 4
      %s23 = int_to_ptr.hbm [resolvable:$true] %s22
      %s24 = sshll.u32 [#allocation3], 4
      %s25 = int_to_ptr.vmem [resolvable:$true] %s24
      %27 = dma.hbm_to_vmem [thread:$0]  %s23, 128, %s25, [#allocation4]
    $region5: #{tpu_custom_call.1} parent=1 // pred_fallthru
      _
    // Predicated region
    $region6: #{tpu_custom_call.1} parent=1 // pred_check
      _
    $region7: #{tpu_custom_call.1} parent=1 // pred_check_branch
      %29 = sbr.rel (0) target = $region9
    $region8: #{tpu_custom_call.1} parent=1 // pred_region
      %31 = vsyncadd [#allocation7], 0
      %s32 = sshll.u32 %s1, 4
      %s33 = int_to_ptr.hbm [resolvable:$true] %s32
      %s34 = sshll.u32 [#allocation6], 4
      %s35 = int_to_ptr.vmem [resolvable:$true] %s34
      %40 = dma.hbm_to_vmem [thread:$0]  %s33, 1024, %s35, [#allocation7], 128, 128, 8
    $region9: #{tpu_custom_call.1} parent=1 // pred_fallthru
      _
    // Predicated region
    $region10: #{tpu_custom_call.1} parent=1 // pred_check
      _
    $region11: #{tpu_custom_call.1} parent=1 // pred_check_branch
      %42 = sbr.rel (0) target = $region13
    $region12: #{tpu_custom_call.1} parent=1 // pred_region
      _
    $region13: #{tpu_custom_call.1} parent=1 // pred_fallthru
      _
    // Predicated region
    $region14: #{tpu_custom_call.1} parent=1 // pred_check
      _
    $region15: #{tpu_custom_call.1} parent=1 // pred_check_branch
      %44 = sbr.rel (0) target = $region17
    $region16: #{tpu_custom_call.1} parent=1 // pred_region
      %46 = vsyncadd [#allocation7], 0
      %s47 = sshll.u32 %s3, 4
      %s48 = int_to_ptr.hbm [resolvable:$true] %s47
      %s49 = sshll.u32 [#allocation8], 4
      %s50 = int_to_ptr.vmem [resolvable:$true] %s49
      %55 = dma.hbm_to_vmem [thread:$0]  %s48, 2048, %s50, [#allocation7], 64, 64, 4
    $region17: #{tpu_custom_call.1} parent=1 // pred_fallthru
      _
    // Predicated region
    $region18: #{tpu_custom_call.1} parent=1 // pred_check
      _
    $region19: #{tpu_custom_call.1} parent=1 // pred_check_branch
      %57 = sbr.rel (0) target = $region21
    $region20: #{tpu_custom_call.1} parent=1 // pred_region
      _
    $region21: #{tpu_custom_call.1} parent=1 // pred_fallthru
      _
    // Predicated region
    $region22: #{tpu_custom_call.1} parent=1 // pred_check
      _
    $region23: #{tpu_custom_call.1} parent=1 // pred_check_branch
      %59 = sbr.rel (0) target = $region25
    $region24: #{tpu_custom_call.1} parent=1 // pred_region
      _
    $region25: #{tpu_custom_call.1} parent=1 // pred_fallthru
      _
    // Predicated region
    $region26: #{tpu_custom_call.1} parent=1 // pred_check
      _
    $region27: #{tpu_custom_call.1} parent=1 // pred_check_branch
      %61 = sbr.rel (0) target = $region29
    $region28: #{tpu_custom_call.1} parent=1 // pred_region
      _
    $region29: #{tpu_custom_call.1} parent=1 // pred_fallthru
      _
    // Predicated region
    $region30: #{tpu_custom_call.1} parent=1 // pred_check
      _
    $region31: #{tpu_custom_call.1} parent=1 // pred_check_branch
      %63 = sbr.rel (0) target = $region33
    $region32: #{tpu_custom_call.1} parent=1 // pred_region
      %65 = dma.done [#allocation4], 128
    $region33: #{tpu_custom_call.1} parent=1 // pred_fallthru
      _
    // Predicated region
    $region34: #{tpu_custom_call.1} parent=1 // pred_check
      _
    $region35: #{tpu_custom_call.1} parent=1 // pred_check_branch
      %67 = sbr.rel (0) target = $region37
    $region36: #{tpu_custom_call.1} parent=1 // pred_region
      %69 = dma.done [#allocation7], 1024
    $region37: #{tpu_custom_call.1} parent=1 // pred_fallthru
      _
    // Predicated region
    $region38: #{tpu_custom_call.1} parent=1 // pred_check
      _
    $region39: #{tpu_custom_call.1} parent=1 // pred_check_branch
      %71 = sbr.rel (0) target = $region41
    $region40: #{tpu_custom_call.1} parent=1 // pred_region
      %73 = dma.done [#allocation7], 2048
    $region41: #{tpu_custom_call.1} parent=1 // pred_fallthru
      _
    %v75 = vld [vmem:[#allocation3] sm:$0xff]
    %v76 = vpack.c.bf16 %v75, %v75
    %v77 = vld [vmem:[#allocation6] sm:$0xff]
    %v78 = vld [vmem:[#allocation6 + $0x8] sm:$0xff]
    %v79 = vld [vmem:[#allocation6 + $0x10] sm:$0xff]
    %v80 = vld [vmem:[#allocation6 + $0x18] sm:$0xff]
    %v81 = vld [vmem:[#allocation6 + $0x20] sm:$0xff]
    %v82 = vld [vmem:[#allocation6 + $0x28] sm:$0xff]
    %v83 = vld [vmem:[#allocation6 + $0x30] sm:$0xff]
    %v84 = vld [vmem:[#allocation6 + $0x38] sm:$0xff]
    %v85 = vld [vmem:[%s2] sm:$0x3]
    %v87 = vperm.slane %v85, 0
    %v88 = vperm.slane %v85, 1
    %v99 = vunpack.c.l.b16 %v77
    %v100 = vunpack.c.h.b16 %v77
    %v101 = vunpack.c.l.b16 %v78
    %v102 = vunpack.c.h.b16 %v78
    %v103 = vunpack.c.l.b16 %v79
    %v104 = vunpack.c.h.b16 %v79
    %v105 = vunpack.c.l.b16 %v80
    %v106 = vunpack.c.h.b16 %v80
    %v107 = vunpack.c.l.b16 %v81
    %v108 = vunpack.c.h.b16 %v81
    %v109 = vunpack.c.l.b16 %v82
    %v110 = vunpack.c.h.b16 %v82
    %v111 = vunpack.c.l.b16 %v83
    %v112 = vunpack.c.h.b16 %v83
    %v113 = vunpack.c.l.b16 %v84
    %v114 = vunpack.c.h.b16 %v84
    %v115 = vpack.c.b16 %v101, %v99
    %v116 = vpack.c.b16 %v102, %v100
    %v117 = vpack.c.b16 %v105, %v103
    %v118 = vpack.c.b16 %v106, %v104
    %v119 = vpack.c.b16 %v109, %v107
    %v120 = vpack.c.b16 %v110, %v108
    %v121 = vpack.c.b16 %v113, %v111
    %v122 = vpack.c.b16 %v114, %v112
    %vm131 = vcmask 523264
    %v133 = vsel %vm131, %v76, 0
    %135 = vmatpush.bf16.msra.mxu0 0
    %136 = vmatpush.bf16.msra.mxu0 0
    %137 = vmatpush.bf16.msra.mxu0 0
    %138 = vmatpush.bf16.msra.mxu0 0
    %139 = vmatpush.bf16.msra.mxu0 %v121
    %140 = vmatpush.bf16.msra.mxu0 %v119
    %141 = vmatpush.bf16.msra.mxu0 %v117
    %142 = vmatpush.bf16.msra.mxu0 %v115
    %143 = vmatmul.bf16.gmra.mxu0 %v133
    %v144 = vpop.f32.mrf.mxu0
    %v145 = vadd.f32 %v87, %v144
    %v146 = vpop.f32.mrf.mxu0
    %147 = vdwg.mxu0
    %148 = vmatpush.bf16.msra.mxu0 0
    %149 = vmatpush.bf16.msra.mxu0 0
    %150 = vmatpush.bf16.msra.mxu0 0
    %151 = vmatpush.bf16.msra.mxu0 0
    %152 = vmatpush.bf16.msra.mxu0 %v122
    %153 = vmatpush.bf16.msra.mxu0 %v120
    %154 = vmatpush.bf16.msra.mxu0 %v118
    %155 = vmatpush.bf16.msra.mxu0 %v116
    %156 = vmatmul.bf16.gmra.mxu0 %v133
    %v157 = vpop.f32.mrf.mxu0
    %v158 = vadd.f32 %v88, %v157
    %v159 = vpop.f32.mrf.mxu0
    %160 = vdwg.mxu0
    %vm161 = vcmp.gt.f32.partialorder %v145, 0.0
    %vm162 = vcmp.gt.f32.partialorder %v158, 0.0
    %v163 = vmul.f32 %v145, 0.2
    %v164 = vmul.f32 %v158, 0.2
    %v165 = vsel %vm161, %v145, %v163
    %v166 = vsel %vm162, %v158, %v164
    %v167 = vpack.c.bf16 %v165, %v165
    %v168 = vpack.c.bf16 %v166, %v166
    %v169 = vld [vmem:[#allocation8] sm:$0xf]
    %v170 = vld [vmem:[#allocation8 + $0x4] sm:$0xf]
    %v171 = vld [vmem:[#allocation8 + $0x8] sm:$0xf]
    %v172 = vld [vmem:[#allocation8 + $0xc] sm:$0xf]
    %v173 = vld [vmem:[#allocation8 + $0x10] sm:$0xf]
    %v174 = vld [vmem:[#allocation8 + $0x14] sm:$0xf]
    %v175 = vld [vmem:[#allocation8 + $0x18] sm:$0xf]
    %v176 = vld [vmem:[#allocation8 + $0x1c] sm:$0xf]
    %v177 = vld [vmem:[#allocation8 + $0x20] sm:$0xf]
    %v178 = vld [vmem:[#allocation8 + $0x24] sm:$0xf]
    %v179 = vld [vmem:[#allocation8 + $0x28] sm:$0xf]
    %v180 = vld [vmem:[#allocation8 + $0x2c] sm:$0xf]
    %v181 = vld [vmem:[#allocation8 + $0x30] sm:$0xf]
    %v182 = vld [vmem:[#allocation8 + $0x34] sm:$0xf]
    %v183 = vld [vmem:[#allocation8 + $0x38] sm:$0xf]
    %v184 = vld [vmem:[#allocation8 + $0x3c] sm:$0xf]
    %v185 = vld [vmem:[#allocation8 + $0x40] sm:$0xf]
    %v186 = vld [vmem:[#allocation8 + $0x44] sm:$0xf]
    %v187 = vld [vmem:[#allocation8 + $0x48] sm:$0xf]
    %v188 = vld [vmem:[#allocation8 + $0x4c] sm:$0xf]
    %v189 = vld [vmem:[#allocation8 + $0x50] sm:$0xf]
    %v190 = vld [vmem:[#allocation8 + $0x54] sm:$0xf]
    %v191 = vld [vmem:[#allocation8 + $0x58] sm:$0xf]
    %v192 = vld [vmem:[#allocation8 + $0x5c] sm:$0xf]
    %v193 = vld [vmem:[#allocation8 + $0x60] sm:$0xf]
    %v194 = vld [vmem:[#allocation8 + $0x64] sm:$0xf]
    %v195 = vld [vmem:[#allocation8 + $0x68] sm:$0xf]
    %v196 = vld [vmem:[#allocation8 + $0x6c] sm:$0xf]
    %v197 = vld [vmem:[#allocation8 + $0x70] sm:$0xf]
    %v198 = vld [vmem:[#allocation8 + $0x74] sm:$0xf]
    %v199 = vld [vmem:[#allocation8 + $0x78] sm:$0xf]
    %v200 = vld [vmem:[#allocation8 + $0x7c] sm:$0xf]
    %v201 = vld [vmem:[%s4] sm:$0x1]
    %v203 = vperm.slane %v201, 0
    %v237 = vunpack.c.l.b16 %v169
    %v238 = vunpack.c.l.b16 %v170
    %v239 = vunpack.c.l.b16 %v171
    %v240 = vunpack.c.l.b16 %v172
    %v241 = vunpack.c.l.b16 %v173
    %v242 = vunpack.c.l.b16 %v174
    %v243 = vunpack.c.l.b16 %v175
    %v244 = vunpack.c.l.b16 %v176
    %v245 = vunpack.c.l.b16 %v177
    %v246 = vunpack.c.l.b16 %v178
    %v247 = vunpack.c.l.b16 %v179
    %v248 = vunpack.c.l.b16 %v180
    %v249 = vunpack.c.l.b16 %v181
    %v250 = vunpack.c.l.b16 %v182
    %v251 = vunpack.c.l.b16 %v183
    %v252 = vunpack.c.l.b16 %v184
    %v253 = vunpack.c.l.b16 %v185
    %v254 = vunpack.c.l.b16 %v186
    %v255 = vunpack.c.l.b16 %v187
    %v256 = vunpack.c.l.b16 %v188
    %v257 = vunpack.c.l.b16 %v189
    %v258 = vunpack.c.l.b16 %v190
    %v259 = vunpack.c.l.b16 %v191
    %v260 = vunpack.c.l.b16 %v192
    %v261 = vunpack.c.l.b16 %v193
    %v262 = vunpack.c.l.b16 %v194
    %v263 = vunpack.c.l.b16 %v195
    %v264 = vunpack.c.l.b16 %v196
    %v265 = vunpack.c.l.b16 %v197
    %v266 = vunpack.c.l.b16 %v198
    %v267 = vunpack.c.l.b16 %v199
    %v268 = vunpack.c.l.b16 %v200
    %v269 = vpack.c.b16 %v238, %v237
    %v270 = vpack.c.b16 %v240, %v239
    %v271 = vpack.c.b16 %v242, %v241
    %v272 = vpack.c.b16 %v244, %v243
    %v273 = vpack.c.b16 %v246, %v245
    %v274 = vpack.c.b16 %v248, %v247
    %v275 = vpack.c.b16 %v250, %v249
    %v276 = vpack.c.b16 %v252, %v251
    %v277 = vpack.c.b16 %v254, %v253
    %v278 = vpack.c.b16 %v256, %v255
    %v279 = vpack.c.b16 %v258, %v257
    %v280 = vpack.c.b16 %v260, %v259
    %v281 = vpack.c.b16 %v262, %v261
    %v282 = vpack.c.b16 %v264, %v263
    %v283 = vpack.c.b16 %v266, %v265
    %v284 = vpack.c.b16 %v268, %v267
    %301 = vmatpush.bf16.msra.mxu0 %v276
    %302 = vmatpush.bf16.msra.mxu0 %v275
    %303 = vmatpush.bf16.msra.mxu0 %v274
    %304 = vmatpush.bf16.msra.mxu0 %v273
    %305 = vmatpush.bf16.msra.mxu0 %v272
    %306 = vmatpush.bf16.msra.mxu0 %v271
    %307 = vmatpush.bf16.msra.mxu0 %v270
    %308 = vmatpush.bf16.msra.mxu0 %v269
    %309 = vmatmul.bf16.gmra.mxu0 %v167
    %v310 = vpop.f32.mrf.mxu0
    %v311 = vadd.f32 %v203, %v310
    %v312 = vpop.f32.mrf.mxu0
    %313 = vdwg.mxu0
    %314 = vmatpush.bf16.msra.mxu0 %v284
    %315 = vmatpush.bf16.msra.mxu0 %v283
    %316 = vmatpush.bf16.msra.mxu0 %v282
    %317 = vmatpush.bf16.msra.mxu0 %v281
    %318 = vmatpush.bf16.msra.mxu0 %v280
    %319 = vmatpush.bf16.msra.mxu0 %v279
    %320 = vmatpush.bf16.msra.mxu0 %v278
    %321 = vmatpush.bf16.msra.mxu0 %v277
    %322 = vmatmul.bf16.gmra.mxu0 %v168
    %v323 = vpop.f32.mrf.mxu0
    %v324 = vadd.f32 %v311, %v323
    %v325 = vpop.f32.mrf.mxu0
    %326 = vdwg.mxu0
    %vm327 = vcmp.gt.f32.partialorder %v324, 0.0
    %v328 = vmul.f32 %v324, 0.2
    %v329 = vsel %vm327, %v324, %v328
    %v330 = vld [vmem:[%s5] sm:$0x1]
    %v331 = vld [vmem:[#allocation2] sm:$0x1]
    %333 = vset.pattern.permute.xlu0 0
    %334 = vperm.xlu0 %333, %v331
    %v335 = vpop.permute.xlu0 %334
    %v337 = vperm.slane %v335, 0
    %338 = vmatpush.xpose.msra.mxu0 0.0
    %339 = vmatpush.xpose.msra.mxu0 0.0
    %340 = vmatpush.xpose.msra.mxu0 0.0
    %341 = vmatpush.xpose.msra.mxu0 0.0
    %342 = vmatpush.xpose.msra.mxu0 0.0
    %343 = vmatpush.xpose.msra.mxu0 0.0
    %344 = vmatpush.xpose.msra.mxu0 0.0
    %345 = vmatpush.xpose.msra.mxu0 0.0
    %346 = vmatpush.xpose.msra.mxu0 0.0
    %347 = vmatpush.xpose.msra.mxu0 0.0
    %348 = vmatpush.xpose.msra.mxu0 0.0
    %349 = vmatpush.xpose.msra.mxu0 0.0
    %350 = vmatpush.xpose.msra.mxu0 0.0
    %351 = vmatpush.xpose.msra.mxu0 0.0
    %352 = vmatpush.xpose.msra.mxu0 0.0
    %353 = vmatpush.xpose.msra.mxu0 %v329
    %354 = vmatmul.f32.gmra.mxu0 %v330
    %v355 = vpop.f32.mrf.mxu0
    %v356 = vadd.f32 %v337, %v355
    %357 = vdwg.mxu0
    %vm358 = vcmask 57344
    %359 = vst.msk [vmem:[#allocation9] sm:$0x1] %vm358, %v356
    // Predicated region
    $region42: #{tpu_custom_call.1} parent=1 // pred_check
      _
    $region43: #{tpu_custom_call.1} parent=1 // pred_check_branch
      %361 = sbr.rel (0) target = $region45
    $region44: #{tpu_custom_call.1} parent=1 // pred_region
      %363 = vsyncadd [#allocation5], 0
      %s365 = sshll.u32 [#allocation9], 4
      %s366 = int_to_ptr.vmem [resolvable:$true] %s365
      %s367 = sshll.u32 %s7, 4
      %s368 = int_to_ptr.hbm [resolvable:$true] %s367
      %370 = dma.vmem_to_hbm [thread:$0]  %s366, 16, %s368, [#allocation5]
    $region45: #{tpu_custom_call.1} parent=1 // pred_fallthru
      _
    // Predicated region
    $region46: #{tpu_custom_call.1} parent=1 // pred_check
      _
    $region47: #{tpu_custom_call.1} parent=1 // pred_check_branch
      %372 = sbr.rel (0) target = $region49
    $region48: #{tpu_custom_call.1} parent=1 // pred_region
      %374 = dma.done [#allocation5], 16
    $region49: #{tpu_custom_call.1} parent=1 // pred_fallthru
      _
    %375 = vsyncpa [#allocation4], 1
    %376 = vsyncpa [#allocation7], 1
    %377 = vsyncpa [#allocation5], 1

</llo_original>
